<compile_context>
chip_gen: v7x
topology: tpu7x:2x2x1
jax: 0.10.0
libtpu: 0.0.40
codegen_flags: <defaults>
</compile_context>

<pallas_src>
import functools

import jax
import jax.numpy as jnp
from jax.experimental import pallas as pl
from jax.experimental.pallas import tpu as pltpu


def _mtl_dynamic_loss_kernel(losses_ref, params_ref, out_ref, *, reduce_scale):
    """out = losses * exp(-(log_vars + log(is_reg+1))) + 0.5*log_vars (f32 compute).

    params_ref rows (built once per parameter update in the wrapper):
      row 0: log_vars + log(is_regression + 1)   -> coeff = exp(-row0)
      row 1: 0.5 * log_vars                      -> log(stds)

    reduce_scale is a static Python float (1.0 for 'sum', 1/n for 'mean') or
    None for elementwise ('none') output.
    """
    losses = losses_ref[...].astype(jnp.float32)      # (1, n)
    shifted_lv = params_ref[0:1, :]                   # (1, n) f32
    half_lv = params_ref[1:2, :]                      # (1, n) f32

    mtl = losses * jnp.exp(-shifted_lv) + half_lv     # one EUP exp + VPU FMAs

    if reduce_scale is None:
        out_ref[...] = mtl.astype(out_ref.dtype)
    else:
        # Scalar result straight to SMEM (no logical padding -> exact sum).
        out_ref[0] = (jnp.sum(mtl) * reduce_scale).astype(out_ref.dtype)


@functools.partial(jax.jit, static_argnames=("reduction",))
def _mtl_dynamic_loss_fwd(losses_2d, params, *, reduction):
    n = losses_2d.shape[1]
    dtype = losses_2d.dtype
    cost = pl.CostEstimate(flops=4 * n, transcendentals=n, bytes_accessed=16 * n)
    in_specs = [
        pl.BlockSpec((1, n), lambda: (0, 0)),   # losses: full-array block (no padding)
        pl.BlockSpec((2, n), lambda: (0, 0)),   # params slab
    ]

    if reduction in ("sum", "mean"):
        scale = 1.0 if reduction == "sum" else 1.0 / n
        kernel = functools.partial(_mtl_dynamic_loss_kernel, reduce_scale=scale)
        out = pl.pallas_call(
            kernel,
            out_shape=jax.ShapeDtypeStruct((1,), jnp.float32),
            grid=(),
            in_specs=in_specs,
            out_specs=pl.BlockSpec(memory_space=pltpu.SMEM),
            cost_estimate=cost,
        )(losses_2d, params)
        return out[0].astype(dtype)

    kernel = functools.partial(_mtl_dynamic_loss_kernel, reduce_scale=None)
    out = pl.pallas_call(
        kernel,
        out_shape=jax.ShapeDtypeStruct((1, n), dtype),
        grid=(),
        in_specs=in_specs,
        out_specs=pl.BlockSpec((1, n), lambda: (0, 0)),
        cost_estimate=cost,
    )(losses_2d, params)
    return out


class MultiTaskDynamicLoss:
    """JAX/Pallas re-implementation of the PyTorch MultiTaskDynamicLoss."""

    def __init__(self, is_regression, reduction="none"):
        self.is_regression = jnp.asarray(is_regression)
        self.n_tasks = int(self.is_regression.shape[0])
        self.reduction = reduction
        # Static per-task shift: log(is_reg + 1) -> log(2) for regression, 0 otherwise.
        self._log_factor = jnp.log(self.is_regression.astype(jnp.float32) + 1.0)
        # Parameter init identical to torch.zeros(n_tasks); setter stages the slab.
        self.log_vars = jnp.zeros((self.n_tasks,), dtype=jnp.float32)

    @property
    def log_vars(self):
        return self._log_vars

    @log_vars.setter
    def log_vars(self, value):
        # Staged ONCE per parameter update (not per call): (2, n) f32 slab.
        self._log_vars = jnp.asarray(value, dtype=jnp.float32).reshape(self.n_tasks)
        self._params = jnp.stack(
            [self._log_vars + self._log_factor, 0.5 * self._log_vars], axis=0
        )

    def __call__(self, losses):
        losses_2d = losses.reshape(1, self.n_tasks)   # metadata-only reshape
        out = _mtl_dynamic_loss_fwd(losses_2d, self._params, reduction=self.reduction)
        if self.reduction in ("sum", "mean"):
            return out
        return out.reshape(losses.shape)


def _reference(losses, log_vars, is_regression, reduction="none"):
    """Pure-JAX reference mirroring the PyTorch forward (f32 params)."""
    dtype = losses.dtype
    stds = (jnp.exp(log_vars) ** 0.5).astype(dtype)
    is_reg = is_regression.astype(dtype)
    coeffs = 1.0 / ((is_reg + 1.0) * stds**2)
    mtl = coeffs * losses + jnp.log(stds)
    if reduction == "sum":
        return mtl.sum()
    if reduction == "mean":
        return mtl.mean()
    return mtl


if __name__ == "__main__":
    key = jax.random.PRNGKey(0)
    n_tasks = 4
    is_regression = jnp.array([True, False, True, False])

    # Per-task scalar losses (what this module consumes).
    losses = jax.random.uniform(key, (n_tasks,), dtype=jnp.float32) * 2.0

    ok = True
    for reduction in ("none", "sum", "mean"):
        mod = MultiTaskDynamicLoss(is_regression, reduction=reduction)
        # Perturb log_vars deterministically so the math is non-trivial.
        mod.log_vars = jnp.linspace(-0.5, 0.5, n_tasks, dtype=jnp.float32)

        out = mod(losses)
        out = jax.block_until_ready(out)

        ref = _reference(losses, mod.log_vars, is_regression, reduction)
        if not jnp.allclose(out, ref, atol=1e-5, rtol=1e-5):
            ok = False
            print(f"MISMATCH reduction={reduction}: {out} vs {ref}")

    if ok:
        print("KERNEL_OK")
</pallas_src>

<mosaic_0001>
module attributes {stable_mosaic.version = 11 : i64} {
  func.func @_mtl_dynamic_loss_kernel(%arg0: memref<1x4xf32, #tpu.memory_space<vmem>>, %arg1: memref<2x4xf32, #tpu.memory_space<vmem>>, %arg2: memref<1x4xf32, #tpu.memory_space<vmem>>) attributes {dimension_semantics = [], scalar_prefetch = 0 : i64, scratch_operands = 0 : i64, tpu.core_type = #tpu.core_type<tc>} {
    %c0 = arith.constant 0 : index
    %c0_0 = arith.constant 0 : index
    %0 = vector.load %arg0[%c0, %c0_0] : memref<1x4xf32, #tpu.memory_space<vmem>>, vector<1x4xf32>
    %c0_1 = arith.constant 0 : index
    %c0_2 = arith.constant 0 : index
    %1 = vector.load %arg1[%c0_1, %c0_2] : memref<2x4xf32, #tpu.memory_space<vmem>>, vector<1x4xf32>
    %c1 = arith.constant 1 : index
    %c0_3 = arith.constant 0 : index
    %2 = vector.load %arg1[%c1, %c0_3] : memref<2x4xf32, #tpu.memory_space<vmem>>, vector<1x4xf32>
    %cst = arith.constant 0.000000e+00 : f32
    %3 = vector.broadcast %cst : f32 to vector<1x4xf32>
    %4 = arith.subf %3, %1 : vector<1x4xf32>
    %5 = math.exp %4 : vector<1x4xf32>
    %6 = arith.mulf %0, %5 : vector<1x4xf32>
    %7 = arith.addf %6, %2 : vector<1x4xf32>
    %c0_4 = arith.constant 0 : index
    %c0_5 = arith.constant 0 : index
    %8 = vector.load %arg2[%c0_4, %c0_5] : memref<1x4xf32, #tpu.memory_space<vmem>>, vector<1x4xf32>
    tpu.vector_store %arg2[%c0_4, %c0_5], %7 {strides = array<i32>} : memref<1x4xf32, #tpu.memory_space<vmem>>, vector<1x4xf32>,
    return
  }
}

</mosaic_0001>

<llo_original>
// kernel: _mtl_dynamic_loss_fwd.1
$region0: #{_mtl_dynamic_loss_fwd.1}
  #allocation0 [shape = 'u32[]', space=smem, size = 0x4, offset = 0x4, fixed_abs, tag = 'smem constant byte address 0x4 - core index']
  #allocation1 [shape = 'u32[144,128]{1,0:T(1,128)}', space=vmem, size = 0x12000, scoped, tag = 'internal scratch']
  %s0 = inlined_call_operand.hbm [shape: f32[1,4], index: 0, kind: input, shape index: {}]
  %s1 = inlined_call_operand.vmem [shape: f32[2,4], index: 1, kind: input, shape index: {}]
  %s2 = inlined_call_operand.hbm [shape: f32[1,4], index: 2, kind: output, shape index: {}]
  %s3 = sld [smem:[#allocation0]]
  $region22: #{_mtl_dynamic_loss_fwd.1} parent=0
    _
  %s5 = ssub.s32 1, %s3
  %s6 = scalar_select 0, %s5, %s3
  $region1: #{_mtl_dynamic_loss_fwd.1} parent=0
    #allocation2 [shape = 'u8[512]{0}', space=vmem, size = 0x400, scoped, tag = 'input window, operand 0, single buffered']
    #allocation3 [shape = 's32[1]{0}', space=sflag, size = 0x4, scoped, tag = 'scoped memory for _mtl_dynamic_loss_fwd.1']
    #allocation4 [shape = 's32[1]{0}', space=sflag, size = 0x4, scoped, tag = 'scoped memory for _mtl_dynamic_loss_fwd.1']
    #allocation5 [shape = 'u8[512]{0}', space=vmem, size = 0x400, scoped, tag = 'output window, operand 0, single buffered']
    %7 = vsyncpa [#allocation3], 0
    %8 = vsyncpa [#allocation4], 0
    // Predicated region
    $region2: #{_mtl_dynamic_loss_fwd.1} parent=1 // pred_check
      _
    $region3: #{_mtl_dynamic_loss_fwd.1} parent=1 // pred_check_branch
      %10 = sbr.rel (0) target = $region5
    $region4: #{_mtl_dynamic_loss_fwd.1} parent=1 // pred_region
      %s12 = ssub.s32 16, 16
      %13 = vsyncadd [#allocation3], %s12
      %s15 = sshll.u32 [#allocation2], 4
      %s16 = int_to_ptr.vmem [resolvable:$true] %s15
      %18 = dma.hbm_to_vmem [thread:$0]  %s0, 16, %s16, [#allocation3]
    $region5: #{_mtl_dynamic_loss_fwd.1} parent=1 // pred_fallthru
      _
    // Predicated region
    $region6: #{_mtl_dynamic_loss_fwd.1} parent=1 // pred_check
      _
    $region7: #{_mtl_dynamic_loss_fwd.1} parent=1 // pred_check_branch
      %20 = sbr.rel (0) target = $region9
    $region8: #{_mtl_dynamic_loss_fwd.1} parent=1 // pred_region
      _
    $region9: #{_mtl_dynamic_loss_fwd.1} parent=1 // pred_fallthru
      _
    // Predicated region
    $region10: #{_mtl_dynamic_loss_fwd.1} parent=1 // pred_check
      _
    $region11: #{_mtl_dynamic_loss_fwd.1} parent=1 // pred_check_branch
      %22 = sbr.rel (0) target = $region13
    $region12: #{_mtl_dynamic_loss_fwd.1} parent=1 // pred_region
      %23 = dma.done [#allocation3], 16
    $region13: #{_mtl_dynamic_loss_fwd.1} parent=1 // pred_fallthru
      _
    %v24 = vld [vmem:[#allocation2] sm:$0x1]
    %v25 = vld [vmem:[%s1] sm:$0x1]
    %v26 = vld [vmem:[%s1 + $0x1] sm:$0x1]
    %v27 = vsub.f32 0.0, %v25
    %v28 = vmul.f32 %v27, 1.442695
    %v29 = vpow.pop %v28
    %v30 = vmul.f32 %v24, %v29
    %v31 = vadd.f32 %v30, %v26
    %vm32 = vcmask 24576
    %33 = vst.msk [vmem:[#allocation5] sm:$0x1] %vm32, %v31
    // Predicated region
    $region14: #{_mtl_dynamic_loss_fwd.1} parent=1 // pred_check
      _
    $region15: #{_mtl_dynamic_loss_fwd.1} parent=1 // pred_check_branch
      %35 = sbr.rel (0) target = $region17
    $region16: #{_mtl_dynamic_loss_fwd.1} parent=1 // pred_region
      %s37 = ssub.s32 16, 16
      %38 = vsyncadd [#allocation4], %s37
      %s40 = sshll.u32 [#allocation5], 4
      %s41 = int_to_ptr.vmem [resolvable:$true] %s40
      %43 = dma.vmem_to_hbm [thread:$0]  %s41, 16, %s2, [#allocation4]
    $region17: #{_mtl_dynamic_loss_fwd.1} parent=1 // pred_fallthru
      _
    // Predicated region
    $region18: #{_mtl_dynamic_loss_fwd.1} parent=1 // pred_check
      _
    $region19: #{_mtl_dynamic_loss_fwd.1} parent=1 // pred_check_branch
      %45 = sbr.rel (0) target = $region21
    $region20: #{_mtl_dynamic_loss_fwd.1} parent=1 // pred_region
      %46 = dma.done [#allocation4], 16
    $region21: #{_mtl_dynamic_loss_fwd.1} parent=1 // pred_fallthru
      _
    %47 = vsyncpa [#allocation3], 1
    %48 = vsyncpa [#allocation4], 1

</llo_original>
